<compile_context>
chip_gen: v6e
topology: v6e:2x2x1
jax: 0.10.0
libtpu: 0.0.40
codegen_flags: <defaults>
</compile_context>

<pallas_src>
import functools

import jax
import jax.numpy as jnp
from jax.experimental import pallas as pl
from jax.experimental.pallas import tpu as pltpu


def _round_up(n, m):
    return n + (-n) % m


def _pad_axis_to(x, axis, target):
    pad = target - x.shape[axis]
    if pad == 0:
        return x
    widths = [(0, 0)] * x.ndim
    widths[axis] = (0, pad)
    return jnp.pad(x, widths)


# ---------------------------------------------------------------------------
# Fused hidden stack: L x (Linear + ReLU) in one pallas_call.
# ---------------------------------------------------------------------------

def _fused_mlp_kernel(x_ref, w_ref, b_ref, o_ref, act_ref):
    """Grid axis 0 = layer index. Activation lives in VMEM scratch (act_ref)."""
    layer = pl.program_id(0)

    @pl.when(layer == 0)
    def _():
        act_ref[...] = x_ref[...].astype(jnp.float32)

    h = jnp.dot(act_ref[...], w_ref[...], preferred_element_type=jnp.float32)
    h = jnp.maximum(h + b_ref[...], 0.0)     # bias (1, D) broadcasts over rows
    act_ref[...] = h

    @pl.when(layer == pl.num_programs(0) - 1)
    def _():
        o_ref[...] = h.astype(o_ref.dtype)


def fused_hidden_stack(x, w_stack, b_stack):
    """x: (Mp, D); w_stack: (L, D, D); b_stack: (L, 1, D). Returns (Mp, D)."""
    Mp, D = x.shape
    L = w_stack.shape[0]
    cost = pl.CostEstimate(
        flops=2 * Mp * D * D * L,
        transcendentals=0,
        bytes_accessed=(w_stack.size + b_stack.size + 2 * Mp * D) * x.dtype.itemsize,
    )
    return pl.pallas_call(
        _fused_mlp_kernel,
        out_shape=jax.ShapeDtypeStruct((Mp, D), x.dtype),
        grid_spec=pltpu.PrefetchScalarGridSpec(
            num_scalar_prefetch=0,
            grid=(L,),
            in_specs=[
                pl.BlockSpec((Mp, D), lambda l: (0, 0)),          # input acts (fetched once)
                pl.BlockSpec((None, D, D), lambda l: (l, 0, 0)),  # this layer's weights
                pl.BlockSpec((None, 1, D), lambda l: (l, 0, 0)),  # this layer's bias
            ],
            # Output block index is constant -> resident; written only at last layer.
            out_specs=pl.BlockSpec((Mp, D), lambda l: (0, 0)),
            scratch_shapes=[pltpu.VMEM((Mp, D), jnp.float32)],
        ),
        compiler_params=pltpu.CompilerParams(
            dimension_semantics=("arbitrary",),   # sequential layer dependency
        ),
        cost_estimate=cost,
    )(x, w_stack, b_stack)


# ---------------------------------------------------------------------------
# One-step Linear (+ optional ReLU) — used for the final (and maybe first) layer.
# ---------------------------------------------------------------------------

def _linear_kernel(x_ref, w_ref, b_ref, o_ref, *, apply_relu):
    h = jnp.dot(x_ref[...], w_ref[...], preferred_element_type=jnp.float32)
    h = h + b_ref[...]
    if apply_relu:
        h = jnp.maximum(h, 0.0)
    o_ref[...] = h.astype(o_ref.dtype)


def linear_pallas(x, w_t, b2d, *, apply_relu):
    """y = relu?(x @ w_t + b).  x: (Mp, K), w_t: (K, Np), b2d: (1, Np); pre-aligned."""
    Mp, K = x.shape
    Np = w_t.shape[1]
    return pl.pallas_call(
        functools.partial(_linear_kernel, apply_relu=apply_relu),
        out_shape=jax.ShapeDtypeStruct((Mp, Np), x.dtype),
        grid_spec=pltpu.PrefetchScalarGridSpec(
            num_scalar_prefetch=0,
            grid=(1,),
            in_specs=[
                pl.BlockSpec((Mp, K), lambda i: (0, 0)),
                pl.BlockSpec((K, Np), lambda i: (0, 0)),
                pl.BlockSpec((1, Np), lambda i: (0, 0)),
            ],
            out_specs=pl.BlockSpec((Mp, Np), lambda i: (0, 0)),
        ),
        compiler_params=pltpu.CompilerParams(
            dimension_semantics=("arbitrary",),
        ),
    )(x, w_t, b2d)


# ---------------------------------------------------------------------------
# Parameters + forward
# ---------------------------------------------------------------------------

def init_params(key, input_dim, hidden_dim, num_layers, num_classes, dtype=jnp.float32):
    """PyTorch-Linear-style init. Weights stored as (in_features, out_features)."""
    params = []
    dims = [input_dim] + [hidden_dim] * num_layers + [num_classes]
    for i in range(len(dims) - 1):
        fan_in, fan_out = dims[i], dims[i + 1]
        key, kw, kb = jax.random.split(key, 3)
        bound = 1.0 / (fan_in ** 0.5)
        w_t = jax.random.uniform(kw, (fan_in, fan_out), dtype, -bound, bound)
        b = jax.random.uniform(kb, (fan_out,), dtype, -bound, bound)
        params.append((w_t, b))
    return params


def prepare_params(params):
    """Pad + stack ONCE, outside the hot path (zero padding keeps the math exact)."""
    *relu_layers, (w_last, b_last) = params
    input_dim = relu_layers[0][0].shape[0]
    hidden_dim = relu_layers[0][0].shape[1]
    num_classes = w_last.shape[1]

    Ip = _round_up(input_dim, 128)
    Dp = _round_up(hidden_dim, 128)
    Cp = _round_up(num_classes, 128)

    if Ip == Dp:
        first = None                        # first layer folds into the fused stack
        stack_layers = relu_layers
    else:
        w0, b0 = relu_layers[0]
        first = (_pad_axis_to(_pad_axis_to(w0, 0, Ip), 1, Dp),
                 _pad_axis_to(b0.reshape(1, -1), 1, Dp))
        stack_layers = relu_layers[1:]

    if stack_layers:
        w_stack = jnp.stack(
            [_pad_axis_to(_pad_axis_to(w, 0, Dp), 1, Dp) for w, _ in stack_layers])
        b_stack = jnp.stack(
            [_pad_axis_to(b.reshape(1, -1), 1, Dp) for _, b in stack_layers])
        hidden = (w_stack, b_stack)
    else:
        hidden = None

    last = (_pad_axis_to(_pad_axis_to(w_last, 0, Dp), 1, Cp),
            _pad_axis_to(b_last.reshape(1, -1), 1, Cp))

    return dict(first=first, hidden=hidden, last=last,
                input_dim=input_dim, input_dim_pad=Ip, num_classes=num_classes)


def make_large_mlp_forward(prepared):
    first = prepared["first"]
    hidden = prepared["hidden"]
    last = prepared["last"]
    input_dim = prepared["input_dim"]
    ip = prepared["input_dim_pad"]
    num_classes = prepared["num_classes"]

    @jax.jit
    def forward(x):
        batch = x.shape[0]
        mp = _round_up(batch, 8)
        h = x
        if (mp, ip) != (batch, input_dim):   # pad once before the first layer
            h = jnp.pad(h, ((0, mp - batch), (0, ip - input_dim)))
        if first is not None:
            h = linear_pallas(h, first[0], first[1], apply_relu=True)
        if hidden is not None:
            h = fused_hidden_stack(h, hidden[0], hidden[1])
        out = linear_pallas(h, last[0], last[1], apply_relu=False)
        return out[:batch, :num_classes]     # single slice at the very end

    return forward


if __name__ == "__main__":
    # Small shapes consistent with the module structure:
    # LargeMLP(input_dim=256, hidden_dim=256, num_layers=8, num_classes=10)
    batch, input_dim, hidden_dim, num_layers, num_classes = 8, 256, 256, 8, 10

    key = jax.random.PRNGKey(0)
    key_x, key_p = jax.random.split(key)
    x = jax.random.normal(key_x, (batch, input_dim), jnp.float32)
    params = init_params(key_p, input_dim, hidden_dim, num_layers, num_classes)

    prepared = prepare_params(params)
    forward = make_large_mlp_forward(prepared)

    y = jax.block_until_ready(forward(x))

    # Plain-JAX reference of the same math (on the original, unpadded params).
    ref = x
    for idx, (w_t, b) in enumerate(params):
        ref = ref @ w_t + b
        if idx != len(params) - 1:
            ref = jnp.maximum(ref, 0.0)

    assert y.shape == (batch, num_classes)
    assert jnp.allclose(y, ref, atol=1e-3, rtol=1e-3), float(jnp.max(jnp.abs(y - ref)))

    print("KERNEL_OK")
</pallas_src>

<mosaic_0001>
module attributes {stable_mosaic.version = 11 : i64} {
  func.func @_linear_kernel(%arg0: i32, %arg1: memref<8x256xf32, #tpu.memory_space<vmem>>, %arg2: memref<256x128xf32, #tpu.memory_space<vmem>>, %arg3: memref<1x128xf32, #tpu.memory_space<vmem>>, %arg4: memref<8x128xf32, #tpu.memory_space<vmem>>) attributes {dimension_semantics = [#tpu.dimension_semantics<arbitrary>], iteration_bounds = array<i64: 1>, scalar_prefetch = 0 : i64, scratch_operands = 0 : i64, tpu.core_type = #tpu.core_type<tc>, window_params = [{pipeline_mode = #tpu.pipeline_mode<synchronous>, transform_indices = @transform_0, window_bounds = array<i64: 8, 256>}, {pipeline_mode = #tpu.pipeline_mode<synchronous>, transform_indices = @transform_1, window_bounds = array<i64: 256, 128>}, {pipeline_mode = #tpu.pipeline_mode<synchronous>, transform_indices = @transform_2, window_bounds = array<i64: 1, 128>}, {pipeline_mode = #tpu.pipeline_mode<synchronous>, transform_indices = @transform_3, window_bounds = array<i64: 8, 128>}]} {
    %c0 = arith.constant 0 : index
    %c0_0 = arith.constant 0 : index
    %0 = vector.load %arg1[%c0, %c0_0] : memref<8x256xf32, #tpu.memory_space<vmem>>, vector<8x256xf32>
    %c0_1 = arith.constant 0 : index
    %c0_2 = arith.constant 0 : index
    %1 = vector.load %arg2[%c0_1, %c0_2] : memref<256x128xf32, #tpu.memory_space<vmem>>, vector<256x128xf32>
    %cst = arith.constant dense<0.000000e+00> : vector<8x128xf32>
    %2 = tpu.matmul %0, %1, %cst {dimension_numbers = #tpu.dot_dimension_numbers<[1], [0], [0], [1], [0, 0, 1, 1], [], []>} : vector<8x256xf32>, vector<256x128xf32>, vector<8x128xf32> -> vector<8x128xf32>
    %c0_3 = arith.constant 0 : index
    %c0_4 = arith.constant 0 : index
    %3 = vector.load %arg3[%c0_3, %c0_4] : memref<1x128xf32, #tpu.memory_space<vmem>>, vector<1x128xf32>
    %4 = vector.broadcast %3 : vector<1x128xf32> to vector<8x128xf32>
    %5 = arith.addf %2, %4 : vector<8x128xf32>
    %c0_5 = arith.constant 0 : index
    %c0_6 = arith.constant 0 : index
    %6 = vector.load %arg4[%c0_5, %c0_6] : memref<8x128xf32, #tpu.memory_space<vmem>>, vector<8x128xf32>
    tpu.vector_store %arg4[%c0_5, %c0_6], %5 {strides = array<i32>} : memref<8x128xf32, #tpu.memory_space<vmem>>, vector<8x128xf32>,
    return
  }
  func.func @transform_0(%arg0: i32) -> (i32, i32) {
    %c0_i32 = arith.constant 0 : i32
    %c0_i32_0 = arith.constant 0 : i32
    %c0_i32_1 = arith.constant 0 : i32
    return %c0_i32, %c0_i32_0 : i32, i32
  }
  func.func @transform_1(%arg0: i32) -> (i32, i32) {
    %c0_i32 = arith.constant 0 : i32
    %c0_i32_0 = arith.constant 0 : i32
    %c0_i32_1 = arith.constant 0 : i32
    return %c0_i32, %c0_i32_0 : i32, i32
  }
  func.func @transform_2(%arg0: i32) -> (i32, i32) {
    %c0_i32 = arith.constant 0 : i32
    %c0_i32_0 = arith.constant 0 : i32
    %c0_i32_1 = arith.constant 0 : i32
    return %c0_i32, %c0_i32_0 : i32, i32
  }
  func.func @transform_3(%arg0: i32) -> (i32, i32) {
    %c0_i32 = arith.constant 0 : i32
    %c0_i32_0 = arith.constant 0 : i32
    %c0_i32_1 = arith.constant 0 : i32
    return %c0_i32, %c0_i32_0 : i32, i32
  }
}

module attributes {stable_mosaic.version = 11 : i64} {
  func.func @_fused_mlp_kernel(%arg0: i32, %arg1: memref<8x256xf32, #tpu.memory_space<vmem>>, %arg2: memref<1x256x256xf32, #tpu.memory_space<vmem>>, %arg3: memref<1x1x256xf32, #tpu.memory_space<vmem>>, %arg4: memref<8x256xf32, #tpu.memory_space<vmem>>, %arg5: memref<8x256xf32, #tpu.memory_space<vmem>>) attributes {dimension_semantics = [#tpu.dimension_semantics<arbitrary>], iteration_bounds = array<i64: 8>, scalar_prefetch = 0 : i64, scratch_operands = 1 : i64, tpu.core_type = #tpu.core_type<tc>, window_params = [{pipeline_mode = #tpu.pipeline_mode<synchronous>, transform_indices = @transform_0, window_bounds = array<i64: 8, 256>}, {transform_indices = @transform_1, window_bounds = array<i64: 1, 256, 256>}, {transform_indices = @transform_2, window_bounds = array<i64: 1, 1, 256>}, {pipeline_mode = #tpu.pipeline_mode<synchronous>, transform_indices = @transform_3, window_bounds = array<i64: 8, 256>}]} {
    %c0_i32 = arith.constant 0 : i32
    %0 = arith.cmpi eq, %arg0, %c0_i32 : i32
    %1 = arith.extui %0 : i1 to i32
    %c0_i32_0 = arith.constant 0 : i32
    %2 = arith.cmpi ne, %1, %c0_i32_0 : i32
    scf.if %2 {
      %c0_12 = arith.constant 0 : index
      %c0_13 = arith.constant 0 : index
      %17 = vector.load %arg1[%c0_12, %c0_13] : memref<8x256xf32, #tpu.memory_space<vmem>>, vector<8x256xf32>
      %c0_14 = arith.constant 0 : index
      %c0_15 = arith.constant 0 : index
      %18 = vector.load %arg5[%c0_14, %c0_15] : memref<8x256xf32, #tpu.memory_space<vmem>>, vector<8x256xf32>
      tpu.vector_store %arg5[%c0_14, %c0_15], %17 {strides = array<i32>} : memref<8x256xf32, #tpu.memory_space<vmem>>, vector<8x256xf32>,
    } else {
    }
    %c0 = arith.constant 0 : index
    %c0_1 = arith.constant 0 : index
    %3 = vector.load %arg5[%c0, %c0_1] : memref<8x256xf32, #tpu.memory_space<vmem>>, vector<8x256xf32>
    %c0_2 = arith.constant 0 : index
    %c0_3 = arith.constant 0 : index
    %c0_4 = arith.constant 0 : index
    %4 = vector.load %arg2[%c0_2, %c0_3, %c0_4] : memref<1x256x256xf32, #tpu.memory_space<vmem>>, vector<1x256x256xf32>
    %5 = vector.shape_cast %4 : vector<1x256x256xf32> to vector<256x256xf32>
    %cst = arith.constant dense<0.000000e+00> : vector<8x256xf32>
    %6 = tpu.matmul %3, %5, %cst {dimension_numbers = #tpu.dot_dimension_numbers<[1], [0], [0], [1], [0, 0, 1, 1], [], []>} : vector<8x256xf32>, vector<256x256xf32>, vector<8x256xf32> -> vector<8x256xf32>
    %c0_5 = arith.constant 0 : index
    %c0_6 = arith.constant 0 : index
    %c0_7 = arith.constant 0 : index
    %7 = vector.load %arg3[%c0_5, %c0_6, %c0_7] : memref<1x1x256xf32, #tpu.memory_space<vmem>>, vector<1x1x256xf32>
    %8 = vector.shape_cast %7 : vector<1x1x256xf32> to vector<1x256xf32>
    %9 = vector.broadcast %8 : vector<1x256xf32> to vector<8x256xf32>
    %10 = arith.addf %6, %9 : vector<8x256xf32>
    %cst_8 = arith.constant 0.000000e+00 : f32
    %11 = vector.broadcast %cst_8 : f32 to vector<8x256xf32>
    %12 = arith.maximumf %10, %11 : vector<8x256xf32>
    %c0_9 = arith.constant 0 : index
    %c0_10 = arith.constant 0 : index
    %13 = vector.load %arg5[%c0_9, %c0_10] : memref<8x256xf32, #tpu.memory_space<vmem>>, vector<8x256xf32>
    tpu.vector_store %arg5[%c0_9, %c0_10], %12 {strides = array<i32>} : memref<8x256xf32, #tpu.memory_space<vmem>>, vector<8x256xf32>,
    %c7_i32 = arith.constant 7 : i32
    %14 = arith.cmpi eq, %arg0, %c7_i32 : i32
    %15 = arith.extui %14 : i1 to i32
    %c0_i32_11 = arith.constant 0 : i32
    %16 = arith.cmpi ne, %15, %c0_i32_11 : i32
    scf.if %16 {
      %c0_12 = arith.constant 0 : index
      %c0_13 = arith.constant 0 : index
      %17 = vector.load %arg4[%c0_12, %c0_13] : memref<8x256xf32, #tpu.memory_space<vmem>>, vector<8x256xf32>
      tpu.vector_store %arg4[%c0_12, %c0_13], %12 {strides = array<i32>} : memref<8x256xf32, #tpu.memory_space<vmem>>, vector<8x256xf32>,
    } else {
    }
    return
  }
  func.func @transform_0(%arg0: i32) -> (i32, i32) {
    %c0_i32 = arith.constant 0 : i32
    %c0_i32_0 = arith.constant 0 : i32
    %c0_i32_1 = arith.constant 0 : i32
    return %c0_i32, %c0_i32_0 : i32, i32
  }
  func.func @transform_1(%arg0: i32) -> (i32, i32, i32) {
    %c0_i32 = arith.constant 0 : i32
    %c0_i32_0 = arith.constant 0 : i32
    %c0_i32_1 = arith.constant 0 : i32
    return %arg0, %c0_i32, %c0_i32_0 : i32, i32, i32
  }
  func.func @transform_2(%arg0: i32) -> (i32, i32, i32) {
    %c0_i32 = arith.constant 0 : i32
    %c0_i32_0 = arith.constant 0 : i32
    %c0_i32_1 = arith.constant 0 : i32
    return %arg0, %c0_i32, %c0_i32_0 : i32, i32, i32
  }
  func.func @transform_3(%arg0: i32) -> (i32, i32) {
    %c0_i32 = arith.constant 0 : i32
    %c0_i32_0 = arith.constant 0 : i32
    %c0_i32_1 = arith.constant 0 : i32
    return %c0_i32, %c0_i32_0 : i32, i32
  }
}

</mosaic_0001>

<llo_original>
// kernel: forward.3
$region0: #{forward.3}
  #allocation0 [shape = 'u32[]', space=smem, size = 0x4, offset = 0x4, fixed_abs, tag = 'smem constant byte address 0x4 - core index']
  #allocation1 [shape = 'u32[144,128]{1,0:T(1,128)}', space=vmem, size = 0x12000, scoped, tag = 'internal scratch']
  %s0 = inlined_call_operand.vmem [shape: f32[8,256], index: 0, kind: input, shape index: {}]
  %s1 = inlined_call_operand.vmem [shape: f32[256,128], index: 1, kind: input, shape index: {}]
  %s2 = inlined_call_operand.vmem [shape: f32[1,128], index: 2, kind: input, shape index: {}]
  %s3 = inlined_call_operand.hbm [shape: f32[8,128], index: 3, kind: output, shape index: {}]
  %s4 = sld [smem:[#allocation0]]
  $region22: #{forward.3} parent=0
    _
  %s6 = ssub.s32 1, %s4
  %s7 = scalar_select 0, %s6, %s4
  $region1: #{forward.3} parent=0
    #allocation2 [shape = 'u8[4096]{0}', space=vmem, size = 0x1000, scoped, tag = 'output window, operand 0, single buffered']
    #allocation3 [shape = 's32[1]{0}', space=sflag, size = 0x4, scoped, tag = 'scoped memory for forward.3']
    %8 = vsyncpa [#allocation3], 0
    // Predicated region
    $region2: #{forward.3} parent=1 // pred_check
      _
    $region3: #{forward.3} parent=1 // pred_check_branch
      %10 = sbr.rel (0) target = $region5
    $region4: #{forward.3} parent=1 // pred_region
      _
    $region5: #{forward.3} parent=1 // pred_fallthru
      _
    // Predicated region
    $region6: #{forward.3} parent=1 // pred_check
      _
    $region7: #{forward.3} parent=1 // pred_check_branch
      %12 = sbr.rel (0) target = $region9
    $region8: #{forward.3} parent=1 // pred_region
      _
    $region9: #{forward.3} parent=1 // pred_fallthru
      _
    // Predicated region
    $region10: #{forward.3} parent=1 // pred_check
      _
    $region11: #{forward.3} parent=1 // pred_check_branch
      %14 = sbr.rel (0) target = $region13
    $region12: #{forward.3} parent=1 // pred_region
      _
    $region13: #{forward.3} parent=1 // pred_fallthru
      _
    %v15 = vld [vmem:[%s0] sm:$0xff]
    %v16 = vld [vmem:[%s0 + $0x8] sm:$0xff]
    %v17 = vld [vmem:[%s1] sm:$0xff]
    %v18 = vld [vmem:[%s1 + $0x8] sm:$0xff]
    %v19 = vld [vmem:[%s1 + $0x10] sm:$0xff]
    %v20 = vld [vmem:[%s1 + $0x18] sm:$0xff]
    %v21 = vld [vmem:[%s1 + $0x20] sm:$0xff]
    %v22 = vld [vmem:[%s1 + $0x28] sm:$0xff]
    %v23 = vld [vmem:[%s1 + $0x30] sm:$0xff]
    %v24 = vld [vmem:[%s1 + $0x38] sm:$0xff]
    %v25 = vld [vmem:[%s1 + $0x40] sm:$0xff]
    %v26 = vld [vmem:[%s1 + $0x48] sm:$0xff]
    %v27 = vld [vmem:[%s1 + $0x50] sm:$0xff]
    %v28 = vld [vmem:[%s1 + $0x58] sm:$0xff]
    %v29 = vld [vmem:[%s1 + $0x60] sm:$0xff]
    %v30 = vld [vmem:[%s1 + $0x68] sm:$0xff]
    %v31 = vld [vmem:[%s1 + $0x70] sm:$0xff]
    %v32 = vld [vmem:[%s1 + $0x78] sm:$0xff]
    %v33 = vld [vmem:[%s1 + $0x80] sm:$0xff]
    %v34 = vld [vmem:[%s1 + $0x88] sm:$0xff]
    %v35 = vld [vmem:[%s1 + $0x90] sm:$0xff]
    %v36 = vld [vmem:[%s1 + $0x98] sm:$0xff]
    %v37 = vld [vmem:[%s1 + $0xa0] sm:$0xff]
    %v38 = vld [vmem:[%s1 + $0xa8] sm:$0xff]
    %v39 = vld [vmem:[%s1 + $0xb0] sm:$0xff]
    %v40 = vld [vmem:[%s1 + $0xb8] sm:$0xff]
    %v41 = vld [vmem:[%s1 + $0xc0] sm:$0xff]
    %v42 = vld [vmem:[%s1 + $0xc8] sm:$0xff]
    %v43 = vld [vmem:[%s1 + $0xd0] sm:$0xff]
    %v44 = vld [vmem:[%s1 + $0xd8] sm:$0xff]
    %v45 = vld [vmem:[%s1 + $0xe0] sm:$0xff]
    %v46 = vld [vmem:[%s1 + $0xe8] sm:$0xff]
    %v47 = vld [vmem:[%s1 + $0xf0] sm:$0xff]
    %v48 = vld [vmem:[%s1 + $0xf8] sm:$0xff]
    %v49 = vld [vmem:[%s2] sm:$0x1]
    %v51 = vlaneseq
    %v52 = vshrl.u32 %v51, 7
    %v53 = vsub.s32 0, %v52
    %v54 = vrot.slane %v49, %v53
    %56 = vmatprep.subr.mxu0 0.0
    %57 = vmatpush1.msra.mxu0 %v32
    %58 = vmatprep.subr.mxu0 0.0
    %59 = vmatpush1.msra.mxu0 %v31
    %60 = vmatprep.subr.mxu0 0.0
    %61 = vmatpush1.msra.mxu0 %v30
    %62 = vmatprep.subr.mxu0 0.0
    %63 = vmatpush1.msra.mxu0 %v29
    %64 = vmatprep.subr.mxu0 0.0
    %65 = vmatpush1.msra.mxu0 %v28
    %66 = vmatprep.subr.mxu0 0.0
    %67 = vmatpush1.msra.mxu0 %v27
    %68 = vmatprep.subr.mxu0 0.0
    %69 = vmatpush1.msra.mxu0 %v26
    %70 = vmatprep.subr.mxu0 0.0
    %71 = vmatpush1.msra.mxu0 %v25
    %72 = vmatprep.subr.mxu0 0.0
    %73 = vmatpush1.msra.mxu0 %v24
    %74 = vmatprep.subr.mxu0 0.0
    %75 = vmatpush1.msra.mxu0 %v23
    %76 = vmatprep.subr.mxu0 0.0
    %77 = vmatpush1.msra.mxu0 %v22
    %78 = vmatprep.subr.mxu0 0.0
    %79 = vmatpush1.msra.mxu0 %v21
    %80 = vmatprep.subr.mxu0 0.0
    %81 = vmatpush1.msra.mxu0 %v20
    %82 = vmatprep.subr.mxu0 0.0
    %83 = vmatpush1.msra.mxu0 %v19
    %84 = vmatprep.subr.mxu0 0.0
    %85 = vmatpush1.msra.mxu0 %v18
    %86 = vmatprep.subr.mxu0 0.0
    %87 = vmatpush1.msra.mxu0 %v17
    %88 = vmatprep.subr.mxu0 0.0
    %89 = vmatpush2.msra.mxu0 %v48
    %90 = vmatprep.subr.mxu0 0.0
    %91 = vmatpush2.msra.mxu0 %v47
    %92 = vmatprep.subr.mxu0 0.0
    %93 = vmatpush2.msra.mxu0 %v46
    %94 = vmatprep.subr.mxu0 0.0
    %95 = vmatpush2.msra.mxu0 %v45
    %96 = vmatprep.subr.mxu0 0.0
    %97 = vmatpush2.msra.mxu0 %v44
    %98 = vmatprep.subr.mxu0 0.0
    %99 = vmatpush2.msra.mxu0 %v43
    %100 = vmatprep.subr.mxu0 0.0
    %101 = vmatpush2.msra.mxu0 %v42
    %102 = vmatprep.subr.mxu0 0.0
    %103 = vmatpush2.msra.mxu0 %v41
    %104 = vmatprep.subr.mxu0 0.0
    %105 = vmatpush2.msra.mxu0 %v40
    %106 = vmatprep.subr.mxu0 0.0
    %107 = vmatpush2.msra.mxu0 %v39
    %108 = vmatprep.subr.mxu0 0.0
    %109 = vmatpush2.msra.mxu0 %v38
    %110 = vmatprep.subr.mxu0 0.0
    %111 = vmatpush2.msra.mxu0 %v37
    %112 = vmatprep.subr.mxu0 0.0
    %113 = vmatpush2.msra.mxu0 %v36
    %114 = vmatprep.subr.mxu0 0.0
    %115 = vmatpush2.msra.mxu0 %v35
    %116 = vmatprep.subr.mxu0 0.0
    %117 = vmatpush2.msra.mxu0 %v34
    %118 = vmatprep.subr.mxu0 0.0
    %119 = vmatpush2.msra.mxu0 %v33
    %120 = vmatprep.mubr.f32.mxu0 %v16
    %121 = vmatmul.mubr.f32.gmra.mxu0 %v15
    %v122 = vpop.f32.mrf.mxu0
    %v123 = vadd.f32 %v54, %v122
    %v124 = vpop.f32.mrf.mxu0
    %125 = vdwg.mxu0
    %126 = vst [vmem:[#allocation2] sm:$0xff] %v123
    // Predicated region
    $region14: #{forward.3} parent=1 // pred_check
      _
    $region15: #{forward.3} parent=1 // pred_check_branch
      %128 = sbr.rel (0) target = $region17
    $region16: #{forward.3} parent=1 // pred_region
      %s130 = ssub.s32 128, 128
      %131 = vsyncadd [#allocation3], %s130
      %s133 = sshll.u32 [#allocation2], 4
      %s134 = int_to_ptr.vmem [resolvable:$true] %s133
      %136 = dma.vmem_to_hbm [thread:$0]  %s134, 128, %s3, [#allocation3]
    $region17: #{forward.3} parent=1 // pred_fallthru
      _
    // Predicated region
    $region18: #{forward.3} parent=1 // pred_check
      _
    $region19: #{forward.3} parent=1 // pred_check_branch
      %138 = sbr.rel (0) target = $region21
    $region20: #{forward.3} parent=1 // pred_region
      %139 = dma.done [#allocation3], 128
    $region21: #{forward.3} parent=1 // pred_fallthru
      _
    %140 = vsyncpa [#allocation3], 1

// kernel: forward.2
$region0: #{forward.2}
  #allocation0 [shape = 'u32[]', space=smem, size = 0x4, offset = 0x4, fixed_abs, tag = 'smem constant byte address 0x4 - core index']
  #allocation1 [shape = 'u32[144,128]{1,0:T(1,128)}', space=vmem, size = 0x12000, scoped, tag = 'internal scratch']
  #allocation2 [shape = 'f32[8,256]{1,0:T(8,128)}', space=vmem, size = 0x2000, scoped, tag = 'scratch operand']
  %s0 = inlined_call_operand.hbm [shape: f32[8,256], index: 0, kind: input, shape index: {}]
  %s1 = inlined_call_operand.hbm [shape: f32[8,256,256], index: 1, kind: input, shape index: {}]
  %s2 = inlined_call_operand.hbm [shape: f32[8,1,256], index: 2, kind: input, shape index: {}]
  %s3 = inlined_call_operand.vmem [shape: f32[8,256], index: 3, kind: output, shape index: {}]
  %s4 = sld [smem:[#allocation0]]
  $region65: #{forward.2} parent=0
    _
  %s6 = ssub.s32 1, %s4
  %s7 = scalar_select 0, %s6, %s4
  $region1: #{forward.2} parent=0
    #allocation3 [shape = 'u8[8192]{0}', space=vmem, size = 0x2000, scoped, tag = 'input window, operand 0, single buffered']
    #allocation4 [shape = 's32[2]{0}', space=sflag, size = 0x8, scoped, tag = 'scoped memory for forward.2']
    #allocation5 [shape = 'u8[524288]{0}', space=vmem, size = 0x80000, scoped, tag = 'input window, operand 1']
    #allocation6 [shape = 's32[2]{0}', space=sflag, size = 0x8, scoped, tag = 'scoped memory for forward.2']
    #allocation7 [shape = 'u8[2048]{0}', space=vmem, size = 0x800, scoped, tag = 'input window, operand 2']
    %8 = vsyncpa [#allocation4], 0
    %9 = vsyncpa [#allocation6], 0
    %s10 = scalar_lea.sflag [#allocation6], 1
    %11 = vsyncpa %s10, 0
    loop: start=0, step=1, limit=10
    $region2: #{forward.2} parent=1 // loop_pre_header
      _
    $region3: #{forward.2} parent=1 // loop_header
      %s13 = sphi 0, %s17
      %p14 = scmp.ge.s32.totalorder %s13, 10
      %s21 = sphi 0, %s21
      %s23 = sphi 0, %s21
      %s24 = sphi 0, %s23
      %s38 = sphi 0, %s24
      %s44 = sphi 0, %s46
      %s47 = sphi 0, %s44
      %s48 = sphi 0, %s47
      %s64 = sphi 0, %s48
      %s70 = sphi 0, %s72
      %s73 = sphi 0, %s70
      %s74 = sphi 0, %s73
      %s90 = sphi 0, %s74
      %s94 = sphi 0, %s94
      %s96 = sphi 0, %s94
      %s97 = sphi 0, %s96
      %s111 = sphi 0, %s97
    $region4: #{forward.2} parent=1 // loop_header_branch
      %16 = sbr.rel (%p14) target = $region8
    $region5: #{forward.2} parent=1 // loop_body
      %s18 = ssub.s32 %s13, 1
      %s19 = ssub.s32 %s13, 2
      %s20 = sadd.s32 %s13, 1
      %s22 = sadd.s32 %s21, 1
      %p25 = scmp.eq.s32.totalorder %s13, 7
      %p26 = scmp.ne.s32.totalorder %s21, %s23
      %p27 = scmp.eq.s32.totalorder %s13, 0
      %p28 = por %p26, %p27
      %p29 = scmp.ne.s32.totalorder %s21, %s23
      %p30 = scmp.eq.s32.totalorder %s18, 7
      %p31 = por %p29, %p30
      %p32 = scmp.ne.s32.totalorder %s23, %s24
      %p33 = scmp.eq.s32.totalorder %s18, 0
      %p34 = por %p32, %p33
      %p35 = scmp.ne.s32.totalorder %s23, %s24
      %p36 = scmp.eq.s32.totalorder %s19, 7
      %p37 = por %p35, %p36
      %p39 = scmp.ne.s32.totalorder %s24, %s38
      %p40 = scmp.eq.s32.totalorder %s19, 0
      %p41 = por %p39, %p40
      %s42 = ssub.s32 %s13, %s20
      %p43 = scmp.eq.s32.totalorder %s42, 0
      %s45 = sadd.s32 %s44, 1
      %s46 = scalar_select %p43, %s44, %s45
      %p49 = pneg %p43
      %p50 = scmp.eq.s32.totalorder %s13, 7
      %p51 = por %p49, %p50
      %p52 = scmp.ne.s32.totalorder %s44, %s47
      %p53 = scmp.eq.s32.totalorder %s13, 0
      %p54 = por %p52, %p53
      %p55 = scmp.ne.s32.totalorder %s44, %s47
      %p56 = scmp.eq.s32.totalorder %s18, 7
      %p57 = por %p55, %p56
      %p58 = scmp.ne.s32.totalorder %s47, %s48
      %p59 = scmp.eq.s32.totalorder %s18, 0
      %p60 = por %p58, %p59
      %p61 = scmp.ne.s32.totalorder %s47, %s48
      %p62 = scmp.eq.s32.totalorder %s19, 7
      %p63 = por %p61, %p62
      %p65 = scmp.ne.s32.totalorder %s48, %s64
      %p66 = scmp.eq.s32.totalorder %s19, 0
      %p67 = por %p65, %p66
      %s68 = ssub.s32 %s13, %s20
      %p69 = scmp.eq.s32.totalorder %s68, 0
      %s71 = sadd.s32 %s70, 1
      %s72 = scalar_select %p69, %s70, %s71
      %p75 = pneg %p69
      %p76 = scmp.eq.s32.totalorder %s13, 7
      %p77 = por %p75, %p76
      %p78 = scmp.ne.s32.totalorder %s70, %s73
      %p79 = scmp.eq.s32.totalorder %s13, 0
      %p80 = por %p78, %p79
      %p81 = scmp.ne.s32.totalorder %s70, %s73
      %p82 = scmp.eq.s32.totalorder %s18, 7
      %p83 = por %p81, %p82
      %p84 = scmp.ne.s32.totalorder %s73, %s74
      %p85 = scmp.eq.s32.totalorder %s18, 0
      %p86 = por %p84, %p85
      %p87 = scmp.ne.s32.totalorder %s73, %s74
      %p88 = scmp.eq.s32.totalorder %s19, 7
      %p89 = por %p87, %p88
      %p91 = scmp.ne.s32.totalorder %s74, %s90
      %p92 = scmp.eq.s32.totalorder %s19, 0
      %p93 = por %p91, %p92
      %s95 = sadd.s32 %s94, 1
      %p98 = scmp.eq.s32.totalorder %s13, 7
      %p99 = scmp.ne.s32.totalorder %s94, %s96
      %p100 = scmp.eq.s32.totalorder %s13, 0
      %p101 = por %p99, %p100
      %p102 = scmp.ne.s32.totalorder %s94, %s96
      %p103 = scmp.eq.s32.totalorder %s18, 7
      %p104 = por %p102, %p103
      %p105 = scmp.ne.s32.totalorder %s96, %s97
      %p106 = scmp.eq.s32.totalorder %s18, 0
      %p107 = por %p105, %p106
      %p108 = scmp.ne.s32.totalorder %s96, %s97
      %p109 = scmp.eq.s32.totalorder %s19, 7
      %p110 = por %p108, %p109
      %p112 = scmp.ne.s32.totalorder %s97, %s111
      %p113 = scmp.eq.s32.totalorder %s19, 0
      %p114 = por %p112, %p113
      %p115 = scmp.le.s32.totalorder 1, %s13
      %p116 = scmp.lt.s32.totalorder %s13, 9
      %p117 = pnand %p115, %p116
      %p118 = pneg %p117
      // Predicated region
      $region9: #{forward.2} parent=5 // pred_check
        _
      $region10: #{forward.2} parent=5 // pred_check_branch
        %120 = sbr.rel (%p117) target = $region12
      $region11: #{forward.2} parent=5 // pred_region
        %s121 = ssub.s32 %s13, 1
        // Predicated region
        $region13: #{forward.2} parent=11 // pred_check
          %p122 = pneg %p34
        $region14: #{forward.2} parent=11 // pred_check_branch
          %124 = sbr.rel (%p122) target = $region16
        $region15: #{forward.2} parent=11 // pred_region
          %s126 = ssub.s32 256, 256
          %127 = vsyncadd [#allocation4], %s126
          %s129 = sshll.u32 [#allocation3], 4
          %s130 = int_to_ptr.vmem [resolvable:$true] %s129
          %132 = dma.hbm_to_vmem [thread:$0]  %s0, 256, %s130, [#allocation4]
        $region16: #{forward.2} parent=11 // pred_fallthru
          _
      $region12: #{forward.2} parent=5 // pred_fallthru
        _
      %p133 = scmp.lt.s32.totalorder %s13, 8
      // Predicated region
      $region17: #{forward.2} parent=5 // pred_check
        %p134 = pneg %p133
      $region18: #{forward.2} parent=5 // pred_check_branch
        %136 = sbr.rel (%p134) target = $region20
      $region19: #{forward.2} parent=5 // pred_region
        // Predicated region
        $region21: #{forward.2} parent=19 // pred_check
          %p137 = pneg %p54
        $region22: #{forward.2} parent=19 // pred_check_branch
          %139 = sbr.rel (%p137) target = $region24
        $region23: #{forward.2} parent=19 // pred_region
          %s140 = sand.u32 %s13, 1
          %s141 = scalar_lea.sflag [#allocation6], %s140
          %s142 = sand.u32 %s44, 1
          %s143 = smul.addr %s142, 512
          %s144 = scalar_lea.vmem [#allocation5], %s143
          %s146 = ssub.s32 8192, 8192
          %147 = vsyncadd %s141, %s146
          %s148 = smul.addr %s13, 64
          %s149 = smul.addr %s148, 128
          %s150 = scalar_lea.hbm %s1, %s149
          %s151 = sshll.u32 %s144, 4
          %s152 = int_to_ptr.vmem [resolvable:$true] %s151
          %157 = dma.hbm_to_vmem [thread:$0]  %s150, 8192, %s152, %s141, 256, 256, 16
        $region24: #{forward.2} parent=19 // pred_fallthru
          _
        // Predicated region
        $region25: #{forward.2} parent=19 // pred_check
          %p158 = pneg %p80
        $region26: #{forward.2} parent=19 // pred_check_branch
          %160 = sbr.rel (%p158) target = $region28
        $region27: #{forward.2} parent=19 // pred_region
          %s161 = sand.u32 %s13, 1
          %s162 = scalar_lea.sflag [#allocation6], %s161
          %s163 = sand.u32 %s70, 1
          %s164 = smul.addr %s163, 2
          %s165 = scalar_lea.vmem [#allocation7], %s164
          %s167 = ssub.s32 32, 32
          %168 = vsyncadd %s162, %s167
          %s169 = smul.addr %s13, 2
          %s170 = smul.addr %s169, 16
          %s171 = scalar_lea.hbm %s2, %s170
          %s173 = sshll.u32 %s165, 4
          %s174 = int_to_ptr.vmem [resolvable:$true] %s173
          %176 = dma.hbm_to_vmem [thread:$0]  %s171, 32, %s174, %s162
        $region28: #{forward.2} parent=19 // pred_fallthru
          _
      $region20: #{forward.2} parent=5 // pred_fallthru
        _
      %p177 = scmp.le.s32.totalorder 1, %s13
      %p178 = scmp.lt.s32.totalorder %s13, 9
      %p179 = pnand %p177, %p178
      %p180 = pneg %p179
      // Predicated region
      $region29: #{forward.2} parent=5 // pred_check
        _
      $region30: #{forward.2} parent=5 // pred_check_branch
        %182 = sbr.rel (%p179) target = $region32
      $region31: #{forward.2} parent=5 // pred_region
        %s183 = ssub.s32 %s13, 1
        // Predicated region
        $region33: #{forward.2} parent=31 // pred_check
          %p184 = pneg %p34
        $region34: #{forward.2} parent=31 // pred_check_branch
          %186 = sbr.rel (%p184) target = $region36
        $region35: #{forward.2} parent=31 // pred_region
          %187 = dma.done [#allocation4], 256
        $region36: #{forward.2} parent=31 // pred_fallthru
          _
        %s188 = sand.u32 %s18, 1
        %s189 = scalar_lea.sflag [#allocation6], %s188
        %s190 = sand.u32 %s47, 1
        %s191 = smul.addr %s190, 512
        %s192 = scalar_lea.vmem [#allocation5], %s191
        // Predicated region
        $region37: #{forward.2} parent=31 // pred_check
          %p193 = pneg %p60
        $region38: #{forward.2} parent=31 // pred_check_branch
          %195 = sbr.rel (%p193) target = $region40
        $region39: #{forward.2} parent=31 // pred_region
          %196 = dma.done %s189, 8192
        $region40: #{forward.2} parent=31 // pred_fallthru
          _
        %s197 = sand.u32 %s18, 1
        %s198 = scalar_lea.sflag [#allocation6], %s197
        %s199 = sand.u32 %s73, 1
        %s200 = smul.addr %s199, 2
        %s201 = scalar_lea.vmem [#allocation7], %s200
        // Predicated region
        $region41: #{forward.2} parent=31 // pred_check
          %p202 = pneg %p86
        $region42: #{forward.2} parent=31 // pred_check_branch
          %204 = sbr.rel (%p202) target = $region44
        $region43: #{forward.2} parent=31 // pred_region
          %205 = dma.done %s198, 32
        $region44: #{forward.2} parent=31 // pred_fallthru
          _
        %p206 = pneg %p34
        %p207 = pneg %p31
        %s208 = sand.u32 %s18, 1
        %s209 = scalar_lea.sflag [#allocation6], %s208
        %s210 = sand.u32 %s47, 1
        %s211 = smul.addr %s210, 512
        %s212 = scalar_lea.vmem [#allocation5], %s211
        %p213 = pneg %p60
        %p214 = pneg %p57
        %s215 = sand.u32 %s18, 1
        %s216 = scalar_lea.sflag [#allocation6], %s215
        %s217 = sand.u32 %s73, 1
        %s218 = smul.addr %s217, 2
        %s219 = scalar_lea.vmem [#allocation7], %s218
        %p220 = pneg %p86
        %p221 = pneg %p83
        %p222 = pneg %p107
        %p223 = pneg %p104
        %p224 = scmp.eq.s32.totalorder %s18, 0
        // Predicated region
        $region45: #{forward.2} parent=31 // pred_check
          %p225 = pneg %p224
        $region46: #{forward.2} parent=31 // pred_check_branch
          %227 = sbr.rel (%p225) target = $region48
        $region47: #{forward.2} parent=31 // pred_region
          %v228 = vld [vmem:[#allocation3] sm:$0xff]
          %v229 = vld [vmem:[#allocation3 + $0x8] sm:$0xff]
          %230 = vst [vmem:[#allocation2] sm:$0xff] %v228
          %231 = vst [vmem:[#allocation2 + $0x8] sm:$0xff] %v229
        $region48: #{forward.2} parent=31 // pred_fallthru
          _
        %v232 = vld [vmem:[#allocation2] sm:$0xff]
        %v233 = vld [vmem:[#allocation2 + $0x8] sm:$0xff]
        %v234 = vld [vmem:[%s192] sm:$0xff]
        %v235 = vld [vmem:[%s192 + $0x8] sm:$0xff]
        %v236 = vld [vmem:[%s192 + $0x10] sm:$0xff]
        %v237 = vld [vmem:[%s192 + $0x18] sm:$0xff]
        %v238 = vld [vmem:[%s192 + $0x20] sm:$0xff]
        %v239 = vld [vmem:[%s192 + $0x28] sm:$0xff]
        %v240 = vld [vmem:[%s192 + $0x30] sm:$0xff]
        %v241 = vld [vmem:[%s192 + $0x38] sm:$0xff]
        %v242 = vld [vmem:[%s192 + $0x40] sm:$0xff]
        %v243 = vld [vmem:[%s192 + $0x48] sm:$0xff]
        %v244 = vld [vmem:[%s192 + $0x50] sm:$0xff]
        %v245 = vld [vmem:[%s192 + $0x58] sm:$0xff]
        %v246 = vld [vmem:[%s192 + $0x60] sm:$0xff]
        %v247 = vld [vmem:[%s192 + $0x68] sm:$0xff]
        %v248 = vld [vmem:[%s192 + $0x70] sm:$0xff]
        %v249 = vld [vmem:[%s192 + $0x78] sm:$0xff]
        %v250 = vld [vmem:[%s192 + $0x80] sm:$0xff]
        %v251 = vld [vmem:[%s192 + $0x88] sm:$0xff]
        %v252 = vld [vmem:[%s192 + $0x90] sm:$0xff]
        %v253 = vld [vmem:[%s192 + $0x98] sm:$0xff]
        %v254 = vld [vmem:[%s192 + $0xa0] sm:$0xff]
        %v255 = vld [vmem:[%s192 + $0xa8] sm:$0xff]
        %v256 = vld [vmem:[%s192 + $0xb0] sm:$0xff]
        %v257 = vld [vmem:[%s192 + $0xb8] sm:$0xff]
        %v258 = vld [vmem:[%s192 + $0xc0] sm:$0xff]
        %v259 = vld [vmem:[%s192 + $0xc8] sm:$0xff]
        %v260 = vld [vmem:[%s192 + $0xd0] sm:$0xff]
        %v261 = vld [vmem:[%s192 + $0xd8] sm:$0xff]
        %v262 = vld [vmem:[%s192 + $0xe0] sm:$0xff]
        %v263 = vld [vmem:[%s192 + $0xe8] sm:$0xff]
        %v264 = vld [vmem:[%s192 + $0xf0] sm:$0xff]
        %v265 = vld [vmem:[%s192 + $0xf8] sm:$0xff]
        %v266 = vld [vmem:[%s192 + $0x100] sm:$0xff]
        %v267 = vld [vmem:[%s192 + $0x108] sm:$0xff]
        %v268 = vld [vmem:[%s192 + $0x110] sm:$0xff]
        %v269 = vld [vmem:[%s192 + $0x118] sm:$0xff]
        %v270 = vld [vmem:[%s192 + $0x120] sm:$0xff]
        %v271 = vld [vmem:[%s192 + $0x128] sm:$0xff]
        %v272 = vld [vmem:[%s192 + $0x130] sm:$0xff]
        %v273 = vld [vmem:[%s192 + $0x138] sm:$0xff]
        %v274 = vld [vmem:[%s192 + $0x140] sm:$0xff]
        %v275 = vld [vmem:[%s192 + $0x148] sm:$0xff]
        %v276 = vld [vmem:[%s192 + $0x150] sm:$0xff]
        %v277 = vld [vmem:[%s192 + $0x158] sm:$0xff]
        %v278 = vld [vmem:[%s192 + $0x160] sm:$0xff]
        %v279 = vld [vmem:[%s192 + $0x168] sm:$0xff]
        %v280 = vld [vmem:[%s192 + $0x170] sm:$0xff]
        %v281 = vld [vmem:[%s192 + $0x178] sm:$0xff]
        %v282 = vld [vmem:[%s192 + $0x180] sm:$0xff]
        %v283 = vld [vmem:[%s192 + $0x188] sm:$0xff]
        %v284 = vld [vmem:[%s192 + $0x190] sm:$0xff]
        %v285 = vld [vmem:[%s192 + $0x198] sm:$0xff]
        %v286 = vld [vmem:[%s192 + $0x1a0] sm:$0xff]
        %v287 = vld [vmem:[%s192 + $0x1a8] sm:$0xff]
        %v288 = vld [vmem:[%s192 + $0x1b0] sm:$0xff]
        %v289 = vld [vmem:[%s192 + $0x1b8] sm:$0xff]
        %v290 = vld [vmem:[%s192 + $0x1c0] sm:$0xff]
        %v291 = vld [vmem:[%s192 + $0x1c8] sm:$0xff]
        %v292 = vld [vmem:[%s192 + $0x1d0] sm:$0xff]
        %v293 = vld [vmem:[%s192 + $0x1d8] sm:$0xff]
        %v294 = vld [vmem:[%s192 + $0x1e0] sm:$0xff]
        %v295 = vld [vmem:[%s192 + $0x1e8] sm:$0xff]
        %v296 = vld [vmem:[%s192 + $0x1f0] sm:$0xff]
        %v297 = vld [vmem:[%s192 + $0x1f8] sm:$0xff]
        %v298 = vld [vmem:[%s201] sm:$0x3]
        %v300 = vlaneseq
        %v301 = vshrl.u32 %v300, 7
        %v302 = vsub.s32 0, %v301
        %v303 = vrot.slane %v298, %v302
        %v304 = vlaneseq
        %v305 = vshrl.u32 %v304, 7
        %v306 = vsub.s32 1, %v305
        %v307 = vrot.slane %v298, %v306
        %310 = vmatprep.subr.mxu0 %v265
        %311 = vmatpush1.msra.mxu0 %v264
        %312 = vmatprep.subr.mxu0 %v263
        %313 = vmatpush1.msra.mxu0 %v262
        %314 = vmatprep.subr.mxu0 %v261
        %315 = vmatpush1.msra.mxu0 %v260
        %316 = vmatprep.subr.mxu0 %v259
        %317 = vmatpush1.msra.mxu0 %v258
        %318 = vmatprep.subr.mxu0 %v257
        %319 = vmatpush1.msra.mxu0 %v256
        %320 = vmatprep.subr.mxu0 %v255
        %321 = vmatpush1.msra.mxu0 %v254
        %322 = vmatprep.subr.mxu0 %v253
        %323 = vmatpush1.msra.mxu0 %v252
        %324 = vmatprep.subr.mxu0 %v251
        %325 = vmatpush1.msra.mxu0 %v250
        %326 = vmatprep.subr.mxu0 %v249
        %327 = vmatpush1.msra.mxu0 %v248
        %328 = vmatprep.subr.mxu0 %v247
        %329 = vmatpush1.msra.mxu0 %v246
        %330 = vmatprep.subr.mxu0 %v245
        %331 = vmatpush1.msra.mxu0 %v244
        %332 = vmatprep.subr.mxu0 %v243
        %333 = vmatpush1.msra.mxu0 %v242
        %334 = vmatprep.subr.mxu0 %v241
        %335 = vmatpush1.msra.mxu0 %v240
        %336 = vmatprep.subr.mxu0 %v239
        %337 = vmatpush1.msra.mxu0 %v238
        %338 = vmatprep.subr.mxu0 %v237
        %339 = vmatpush1.msra.mxu0 %v236
        %340 = vmatprep.subr.mxu0 %v235
        %341 = vmatpush1.msra.mxu0 %v234
        %342 = vmatprep.subr.mxu0 %v297
        %343 = vmatpush2.msra.mxu0 %v296
        %344 = vmatprep.subr.mxu0 %v295
        %345 = vmatpush2.msra.mxu0 %v294
        %346 = vmatprep.subr.mxu0 %v293
        %347 = vmatpush2.msra.mxu0 %v292
        %348 = vmatprep.subr.mxu0 %v291
        %349 = vmatpush2.msra.mxu0 %v290
        %350 = vmatprep.subr.mxu0 %v289
        %351 = vmatpush2.msra.mxu0 %v288
        %352 = vmatprep.subr.mxu0 %v287
        %353 = vmatpush2.msra.mxu0 %v286
        %354 = vmatprep.subr.mxu0 %v285
        %355 = vmatpush2.msra.mxu0 %v284
        %356 = vmatprep.subr.mxu0 %v283
        %357 = vmatpush2.msra.mxu0 %v282
        %358 = vmatprep.subr.mxu0 %v281
        %359 = vmatpush2.msra.mxu0 %v280
        %360 = vmatprep.subr.mxu0 %v279
        %361 = vmatpush2.msra.mxu0 %v278
        %362 = vmatprep.subr.mxu0 %v277
        %363 = vmatpush2.msra.mxu0 %v276
        %364 = vmatprep.subr.mxu0 %v275
        %365 = vmatpush2.msra.mxu0 %v274
        %366 = vmatprep.subr.mxu0 %v273
        %367 = vmatpush2.msra.mxu0 %v272
        %368 = vmatprep.subr.mxu0 %v271
        %369 = vmatpush2.msra.mxu0 %v270
        %370 = vmatprep.subr.mxu0 %v269
        %371 = vmatpush2.msra.mxu0 %v268
        %372 = vmatprep.subr.mxu0 %v267
        %373 = vmatpush2.msra.mxu0 %v266
        %374 = vmatprep.mubr.f32.mxu0 %v233
        %375 = vmatmul.mubr.f32.gmra.mxu0 %v232
        %v376 = vpop.f32.mrf.mxu0
        %v377 = vadd.f32 %v303, %v376
        %v378 = vpop.f32.mrf.mxu0
        %v379 = vadd.f32 %v307, %v378
        %380 = vdwg.mxu0
        %v381 = vmax.f32 %v377, 0.0
        %v382 = vmax.f32 %v379, 0.0
        %383 = vst [vmem:[#allocation2] sm:$0xff] %v381
        %384 = vst [vmem:[#allocation2 + $0x8] sm:$0xff] %v382
        %p385 = scmp.eq.s32.totalorder %s18, 7
        // Predicated region
        $region49: #{forward.2} parent=31 // pred_check
          %p386 = pneg %p385
        $region50: #{forward.2} parent=31 // pred_check_branch
          %388 = sbr.rel (%p386) target = $region52
        $region51: #{forward.2} parent=31 // pred_region
          %389 = vst [vmem:[%s3] sm:$0xff] %v381
          %390 = vst [vmem:[%s3 + $0x8] sm:$0xff] %v382
        $region52: #{forward.2} parent=31 // pred_fallthru
          _
        // Predicated region
        $region53: #{forward.2} parent=31 // pred_check
          %p391 = pneg %p104
        $region54: #{forward.2} parent=31 // pred_check_branch
          %393 = sbr.rel (%p391) target = $region56
        $region55: #{forward.2} parent=31 // pred_region
          _
        $region56: #{forward.2} parent=31 // pred_fallthru
          _
        // Predicated region
        $region57: #{forward.2} parent=31 // pred_check
          %p394 = pneg %p104
        $region58: #{forward.2} parent=31 // pred_check_branch
          %396 = sbr.rel (%p394) target = $region60
        $region59: #{forward.2} parent=31 // pred_region
          _
        $region60: #{forward.2} parent=31 // pred_fallthru
          _
      $region32: #{forward.2} parent=5 // pred_fallthru
        _
      %p397 = scmp.le.s32.totalorder 2, %s13
      // Predicated region
      $region61: #{forward.2} parent=5 // pred_check
        %p398 = pneg %p397
      $region62: #{forward.2} parent=5 // pred_check_branch
        %400 = sbr.rel (%p398) target = $region64
      $region63: #{forward.2} parent=5 // pred_region
        %s401 = ssub.s32 %s13, 2
      $region64: #{forward.2} parent=5 // pred_fallthru
        _
    $region6: #{forward.2} parent=1 // loop_footer
      %s17 = sadd.s32 1, %s13
    $region7: #{forward.2} parent=1 // loop_footer_branch
      %12 = sbr.rel target = $region3
    $region8: #{forward.2} parent=1 // loop_exit
      _
    %402 = vsyncpa [#allocation4], 1
    %s403 = scalar_lea.sflag [#allocation4], 1
    %404 = vsyncpa %s403, 1
    %405 = vsyncpa [#allocation6], 1
    %s406 = scalar_lea.sflag [#allocation6], 1
    %407 = vsyncpa %s406, 1

</llo_original>
